<compile_context>
chip_gen: v7x
topology: tpu7x:2x2x1
jax: 0.10.0
libtpu: 0.0.40
codegen_flags: <defaults>
</compile_context>

<pallas_src>
import jax
import jax.numpy as jnp
from jax.experimental import pallas as pl
from jax.experimental.pallas import tpu as pltpu


def _round_up(x: int, m: int) -> int:
    return ((x + m - 1) // m) * m


def _classifier_kernel(x_ref, wt_ref, b_ref, o_ref):
    # x_ref:  (tm, C)  activation dtype (f32 or bf16)
    # wt_ref: (C,  K)  pre-transposed weight, same dtype as x
    # b_ref:  (1,  K)  f32 bias
    # o_ref:  (tm, K)
    y = jnp.dot(x_ref[...], wt_ref[...], preferred_element_type=jnp.float32)
    o_ref[...] = (y + b_ref[...]).astype(o_ref.dtype)


def classifier_1fc_forward(x, weight, bias, droprate=0.0, *,
                           block_rows=4096, min_rows_for_pallas=4096):
    """Pallas implementation of Classifier_1fc.forward.

    x:      [..., n_channels]
    weight: [n_classes, n_channels]
    bias:   [n_classes]
    block_rows: row-tile size (rounded to the sublane multiple: 8 for f32, 16 for bf16).
    min_rows_for_pallas: below this row count use plain XLA (kernel overhead dominates;
        standalone, XLA's gemm is already near the HBM roofline).
    """
    if droprate != 0.0:
        # TODO(synk): training-mode dropout (RNG masking) not implemented; droprate=0.0 path only.
        raise NotImplementedError("droprate != 0.0 not supported in this kernel")

    orig_lead = x.shape[:-1]
    c = x.shape[-1]
    k = weight.shape[0]
    x2 = x.reshape(-1, c)
    n = x2.shape[0]
    out_dtype = x.dtype

    # Tiny problems: skip pallas_call overhead entirely.
    if n < min_rows_for_pallas:
        # Note: weight is cast to x's dtype (same choice as the kernel path below).
        y = jnp.dot(x2, weight.T.astype(x2.dtype), preferred_element_type=jnp.float32)
        y = (y + bias.astype(jnp.float32)).astype(out_dtype)
        return y.reshape(orig_lead + (k,))

    # ---- Pallas path -----------------------------------------------------------------
    # Sublane packing: (8,128) for 32-bit, (16,128) for 16-bit dtypes.
    sub = 16 if jnp.dtype(x2.dtype).itemsize == 2 else 8
    tm = max(sub, min(_round_up(block_rows, sub), _round_up(n, sub)))
    # Keep >= ~8 grid steps when there is enough work so v7x's two TensorCores both
    # stay busy, without letting tiles shrink to where per-step overhead dominates.
    if n >= 8 * 1024:
        tm = max(min(tm, _round_up(pl.cdiv(n, 8), sub)), 1024)

    grid = (pl.cdiv(n, tm),)  # ragged final block handled by Pallas boundary masking

    wt = weight.T.astype(x2.dtype)                # (C, K) — tiny, transposed once
    b2 = bias.astype(jnp.float32).reshape(1, k)   # (1, K) f32

    in_itemsize = jnp.dtype(x2.dtype).itemsize
    out_itemsize = jnp.dtype(out_dtype).itemsize

    # Advisory cost estimate: the traffic the kernel actually performs (no padding).
    cost = pl.CostEstimate(
        flops=2 * n * c * k,
        transcendentals=0,
        bytes_accessed=(n * c * in_itemsize        # x
                        + c * k * in_itemsize      # W.T
                        + k * 4                    # bias
                        + n * k * out_itemsize),   # output
    )

    def _vmem_footprint(rows, cols, itemsize, nbuf):
        # VMEM buffers are laid out on (8,128) tiles ((16,128) for 16-bit dtypes).
        r = _round_up(rows, 16 if itemsize == 2 else 8)
        return nbuf * r * _round_up(cols, 128) * itemsize

    footprint = (_vmem_footprint(tm, c, in_itemsize, 2)      # x tile, double-buffered
                 + _vmem_footprint(tm, k, out_itemsize, 2)   # out tile, double-buffered
                 + _vmem_footprint(c, k, in_itemsize, 1)     # resident W.T
                 + _vmem_footprint(1, k, 4, 1))              # resident bias
    # +50% margin; floor to a safe small value, cap well under v7x's 64 MiB physical.
    vmem_limit = int(min(max(footprint + footprint // 2, 16 * 1024 * 1024),
                         56 * 1024 * 1024))

    out = pl.pallas_call(
        _classifier_kernel,
        out_shape=jax.ShapeDtypeStruct((n, k), out_dtype),
        grid_spec=pltpu.PrefetchScalarGridSpec(
            num_scalar_prefetch=0,
            grid=grid,
            in_specs=[
                pl.BlockSpec((tm, c), lambda i: (i, 0)),   # x: streamed row tiles
                pl.BlockSpec((c, k), lambda i: (0, 0)),    # W.T: resident
                pl.BlockSpec((1, k), lambda i: (0, 0)),    # bias: resident
            ],
            out_specs=pl.BlockSpec((tm, k), lambda i: (i, 0)),
        ),
        compiler_params=pltpu.CompilerParams(
            dimension_semantics=("parallel",),
            vmem_limit_bytes=vmem_limit,
        ),
        cost_estimate=cost,
    )(x2, wt, b2)

    return out.reshape(orig_lead + (k,))


if __name__ == "__main__":
    key = jax.random.PRNGKey(0)
    k_x, k_w, k_b, k_x2 = jax.random.split(key, 4)

    n_channels = 32   # feature dim
    n_classes = 4     # number of classes
    batch = 8         # number of feature vectors (small demo shape)

    x = jax.random.normal(k_x, (batch, n_channels), dtype=jnp.float32)
    weight = jax.random.normal(k_w, (n_classes, n_channels), dtype=jnp.float32) * 0.1
    bias = jax.random.normal(k_b, (n_classes,), dtype=jnp.float32) * 0.1

    # Force the Pallas path even at demo size so the kernel is exercised.
    out = classifier_1fc_forward(x, weight, bias, droprate=0.0,
                                 min_rows_for_pallas=0)
    jax.block_until_ready(out)

    ref = x @ weight.T + bias
    assert out.shape == (batch, n_classes)
    assert jnp.allclose(out, ref, atol=1e-5, rtol=1e-5)

    # Second check: multi-tile grid with a ragged final block (300 % 128 != 0).
    x_big = jax.random.normal(k_x2, (300, n_channels), dtype=jnp.float32)
    out_big = classifier_1fc_forward(x_big, weight, bias, droprate=0.0,
                                     block_rows=128, min_rows_for_pallas=0)
    jax.block_until_ready(out_big)
    ref_big = x_big @ weight.T + bias
    assert out_big.shape == (300, n_classes)
    assert jnp.allclose(out_big, ref_big, atol=1e-5, rtol=1e-5)

    print("KERNEL_OK")
</pallas_src>

<mosaic_0001>
module attributes {stable_mosaic.version = 11 : i64} {
  func.func @_classifier_kernel(%arg0: i32, %arg1: memref<8x32xf32, #tpu.memory_space<vmem>>, %arg2: memref<32x4xf32, #tpu.memory_space<vmem>>, %arg3: memref<1x4xf32, #tpu.memory_space<vmem>>, %arg4: memref<8x4xf32, #tpu.memory_space<vmem>>) attributes {dimension_semantics = [#tpu.dimension_semantics<parallel>], iteration_bounds = array<i64: 1>, scalar_prefetch = 0 : i64, scratch_operands = 0 : i64, tpu.core_type = #tpu.core_type<tc>, window_params = [{transform_indices = @transform_0, window_bounds = array<i64: 8, 32>}, {pipeline_mode = #tpu.pipeline_mode<synchronous>, transform_indices = @transform_1, window_bounds = array<i64: 32, 4>}, {pipeline_mode = #tpu.pipeline_mode<synchronous>, transform_indices = @transform_2, window_bounds = array<i64: 1, 4>}, {transform_indices = @transform_3, window_bounds = array<i64: 8, 4>}]} {
    %c0 = arith.constant 0 : index
    %c0_0 = arith.constant 0 : index
    %0 = vector.load %arg1[%c0, %c0_0] : memref<8x32xf32, #tpu.memory_space<vmem>>, vector<8x32xf32>
    %c0_1 = arith.constant 0 : index
    %c0_2 = arith.constant 0 : index
    %1 = vector.load %arg2[%c0_1, %c0_2] : memref<32x4xf32, #tpu.memory_space<vmem>>, vector<32x4xf32>
    %cst = arith.constant dense<0.000000e+00> : vector<8x4xf32>
    %2 = tpu.matmul %0, %1, %cst {dimension_numbers = #tpu.dot_dimension_numbers<[1], [0], [0], [1], [0, 0, 1, 1], [], []>} : vector<8x32xf32>, vector<32x4xf32>, vector<8x4xf32> -> vector<8x4xf32>
    %c0_3 = arith.constant 0 : index
    %c0_4 = arith.constant 0 : index
    %3 = vector.load %arg3[%c0_3, %c0_4] : memref<1x4xf32, #tpu.memory_space<vmem>>, vector<1x4xf32>
    %4 = vector.broadcast %3 : vector<1x4xf32> to vector<8x4xf32>
    %5 = arith.addf %2, %4 : vector<8x4xf32>
    %c0_5 = arith.constant 0 : index
    %c0_6 = arith.constant 0 : index
    %6 = vector.load %arg4[%c0_5, %c0_6] : memref<8x4xf32, #tpu.memory_space<vmem>>, vector<8x4xf32>
    tpu.vector_store %arg4[%c0_5, %c0_6], %5 {strides = array<i32>} : memref<8x4xf32, #tpu.memory_space<vmem>>, vector<8x4xf32>,
    return
  }
  func.func @transform_0(%arg0: i32) -> (i32, i32) {
    %c0_i32 = arith.constant 0 : i32
    %c0_i32_0 = arith.constant 0 : i32
    return %arg0, %c0_i32 : i32, i32
  }
  func.func @transform_1(%arg0: i32) -> (i32, i32) {
    %c0_i32 = arith.constant 0 : i32
    %c0_i32_0 = arith.constant 0 : i32
    %c0_i32_1 = arith.constant 0 : i32
    return %c0_i32, %c0_i32_0 : i32, i32
  }
  func.func @transform_2(%arg0: i32) -> (i32, i32) {
    %c0_i32 = arith.constant 0 : i32
    %c0_i32_0 = arith.constant 0 : i32
    %c0_i32_1 = arith.constant 0 : i32
    return %c0_i32, %c0_i32_0 : i32, i32
  }
  func.func @transform_3(%arg0: i32) -> (i32, i32) {
    %c0_i32 = arith.constant 0 : i32
    %c0_i32_0 = arith.constant 0 : i32
    return %arg0, %c0_i32 : i32, i32
  }
}

</mosaic_0001>

<llo_original>
// kernel: tpu_custom_call.1
$region0: #{tpu_custom_call.1}
  #allocation0 [shape = 'u32[]', space=smem, size = 0x4, offset = 0x4, fixed_abs, tag = 'smem constant byte address 0x4 - core index']
  #allocation1 [shape = 'u32[144,128]{1,0:T(1,128)}', space=vmem, size = 0x12000, scoped, tag = 'internal scratch']
  %s0 = inlined_call_operand.vmem [shape: f32[8,32], index: 0, kind: input, shape index: {}]
  %s1 = inlined_call_operand.vmem [shape: f32[32,4], index: 1, kind: input, shape index: {}]
  %s2 = inlined_call_operand.vmem [shape: f32[1,4], index: 2, kind: input, shape index: {}]
  %s3 = inlined_call_operand.vmem [shape: f32[8,4], index: 3, kind: output, shape index: {}]
  %s4 = sld [smem:[#allocation0]]
  $region22: #{tpu_custom_call.1} parent=0
    _
  %s6 = ssub.s32 1, %s4
  %s7 = scalar_select 0, %s6, %s4
  // Predicated region
  $region2: #{tpu_custom_call.1} parent=0 // pred_check
    _
  $region3: #{tpu_custom_call.1} parent=0 // pred_check_branch
    %9 = sbr.rel (0) target = $region5
  $region4: #{tpu_custom_call.1} parent=0 // pred_region
    _
  $region5: #{tpu_custom_call.1} parent=0 // pred_fallthru
    _
  // Predicated region
  $region6: #{tpu_custom_call.1} parent=0 // pred_check
    _
  $region7: #{tpu_custom_call.1} parent=0 // pred_check_branch
    %11 = sbr.rel (0) target = $region9
  $region8: #{tpu_custom_call.1} parent=0 // pred_region
    _
  $region9: #{tpu_custom_call.1} parent=0 // pred_fallthru
    _
  // Predicated region
  $region10: #{tpu_custom_call.1} parent=0 // pred_check
    _
  $region11: #{tpu_custom_call.1} parent=0 // pred_check_branch
    %13 = sbr.rel (0) target = $region13
  $region12: #{tpu_custom_call.1} parent=0 // pred_region
    _
  $region13: #{tpu_custom_call.1} parent=0 // pred_fallthru
    _
  %v14 = vld [vmem:[%s0] sm:$0xff]
  %v15 = vld [vmem:[%s1] sm:$0xff]
  %v16 = vld [vmem:[%s1 + $0x8] sm:$0xff]
  %v17 = vld [vmem:[%s1 + $0x10] sm:$0xff]
  %v18 = vld [vmem:[%s1 + $0x18] sm:$0xff]
  %v19 = vld [vmem:[%s2] sm:$0x1]
  %v21 = vlaneseq
  %v22 = vshrl.u32 %v21, 7
  %v23 = vsub.s32 0, %v22
  %v24 = vrot.slane %v19, %v23
  %vm26 = vcmask 261120
  %v28 = vsel %vm26, %v14, 0
  %30 = vmatprep.subr.mxu0 0.0
  %31 = vmatpush1.msra.mxu0 %v15
  %32 = vmatprep.subr.mxu0 0.0
  %33 = vmatpush1.msra.mxu0 %v16
  %34 = vmatprep.subr.mxu0 0.0
  %35 = vmatpush1.msra.mxu0 %v17
  %36 = vmatprep.subr.mxu0 0.0
  %37 = vmatpush1.msra.mxu0 %v18
  %38 = vmatprep.subr.mxu0 0.0
  %39 = vmatpush1.msra.mxu0 0.0
  %40 = vmatprep.subr.mxu0 0.0
  %41 = vmatpush1.msra.mxu0 0.0
  %42 = vmatprep.subr.mxu0 0.0
  %43 = vmatpush1.msra.mxu0 0.0
  %44 = vmatprep.subr.mxu0 0.0
  %45 = vmatpush1.msra.mxu0 0.0
  %46 = vmatprep.subr.mxu0 0.0
  %47 = vmatpush1.msra.mxu0 0.0
  %48 = vmatprep.subr.mxu0 0.0
  %49 = vmatpush1.msra.mxu0 0.0
  %50 = vmatprep.subr.mxu0 0.0
  %51 = vmatpush1.msra.mxu0 0.0
  %52 = vmatprep.subr.mxu0 0.0
  %53 = vmatpush1.msra.mxu0 0.0
  %54 = vmatprep.subr.mxu0 0.0
  %55 = vmatpush1.msra.mxu0 0.0
  %56 = vmatprep.subr.mxu0 0.0
  %57 = vmatpush1.msra.mxu0 0.0
  %58 = vmatprep.subr.mxu0 0.0
  %59 = vmatpush1.msra.mxu0 0.0
  %60 = vmatprep.subr.mxu0 0.0
  %61 = vmatpush1.msra.mxu0 0.0
  %62 = vmatprep.subr.mxu0 0.0
  %63 = vmatpush1.msra.mxu0 0.0
  %64 = vmatprep.subr.mxu0 0.0
  %65 = vmatpush1.msra.mxu0 0.0
  %66 = vmatprep.subr.mxu0 0.0
  %67 = vmatpush1.msra.mxu0 0.0
  %68 = vmatprep.subr.mxu0 0.0
  %69 = vmatpush1.msra.mxu0 0.0
  %70 = vmatprep.subr.mxu0 0.0
  %71 = vmatpush1.msra.mxu0 0.0
  %72 = vmatprep.subr.mxu0 0.0
  %73 = vmatpush1.msra.mxu0 0.0
  %74 = vmatprep.subr.mxu0 0.0
  %75 = vmatpush1.msra.mxu0 0.0
  %76 = vmatprep.subr.mxu0 0.0
  %77 = vmatpush1.msra.mxu0 0.0
  %78 = vmatprep.subr.mxu0 0.0
  %79 = vmatpush1.msra.mxu0 0.0
  %80 = vmatprep.subr.mxu0 0.0
  %81 = vmatpush1.msra.mxu0 0.0
  %82 = vmatprep.subr.mxu0 0.0
  %83 = vmatpush1.msra.mxu0 0.0
  %84 = vmatprep.subr.mxu0 0.0
  %85 = vmatpush1.msra.mxu0 0.0
  %86 = vmatprep.subr.mxu0 0.0
  %87 = vmatpush1.msra.mxu0 0.0
  %88 = vmatprep.subr.mxu0 0.0
  %89 = vmatpush1.msra.mxu0 0.0
  %90 = vmatprep.subr.mxu0 0.0
  %91 = vmatpush1.msra.mxu0 0.0
  %92 = vmatprep.subr.mxu0 0.0
  %93 = vmatpush1.msra.mxu0 0.0
  %94 = vmatprep.mubr.f32.mxu0 0.0
  %95 = vmatmul.mubr.f32.gmra.mrb[0].mxu0 %v28
  %v96 = vpop.f32.mrb[0].mxu0
  %v97 = vadd.f32 %v24, %v96
  %v98 = vpop.f32.mrb[0].mxu0
  %99 = vdwg.mxu0
  %vm100 = vcmask 31744
  %101 = vst.msk [vmem:[%s3] sm:$0xff] %vm100, %v97
  // Predicated region
  $region14: #{tpu_custom_call.1} parent=0 // pred_check
    _
  $region15: #{tpu_custom_call.1} parent=0 // pred_check_branch
    %103 = sbr.rel (0) target = $region17
  $region16: #{tpu_custom_call.1} parent=0 // pred_region
    _
  $region17: #{tpu_custom_call.1} parent=0 // pred_fallthru
    _
  // Predicated region
  $region18: #{tpu_custom_call.1} parent=0 // pred_check
    _
  $region19: #{tpu_custom_call.1} parent=0 // pred_check_branch
    %105 = sbr.rel (0) target = $region21
  $region20: #{tpu_custom_call.1} parent=0 // pred_region
    _
  $region21: #{tpu_custom_call.1} parent=0 // pred_fallthru
    _

</llo_original>
